<compile_context>
chip_gen: v6e
topology: v6e:2x2x1
jax: 0.10.0
libtpu: 0.0.40
codegen_flags: <defaults>
</compile_context>

<pallas_src>
import functools

import jax
import jax.numpy as jnp
from jax.experimental import pallas as pl
from jax.experimental.pallas import tpu as pltpu

LANE = 128


def _round_up(x, m):
    return ((x + m - 1) // m) * m


def _cdiv(a, b):
    return (a + b - 1) // b


def _pad2(a, rows, cols):
    r, c = a.shape
    if (r, c) == (rows, cols):
        return a
    return jnp.pad(a, ((0, rows - r), (0, cols - c)))


def _num_tensorcores():
    """2 TensorCores/chip on v7x; treat everything else as 1 (megacore handled by XLA)."""
    try:
        kind = jax.devices()[0].device_kind.lower()
        if "v7" in kind or "7x" in kind:
            return 2
    except Exception:
        pass
    return 1


def _vmem_capacity_bytes():
    """Generation-aware physical VMEM capacity with a conservative fallback."""
    try:
        return int(pltpu.get_tpu_info().vmem_capacity_bytes)
    except Exception:
        pass
    try:
        kind = jax.devices()[0].device_kind.lower()
        if "v7" in kind or "7x" in kind:
            return 64 << 20
        return 128 << 20  # v4 / v5e / v6e
    except Exception:
        return 64 << 20    # safest ceiling


# --------------------------------------------------------------------------- kernel


def _mlp_kernel(x_ref, w1_ref, b1_ref, w2_ref, b2_ref, w3_ref, b3_ref, o_ref):
    # x_ref: (tm, D_in_p) in the caller's dtype.  Cast to bf16 here (VPU, free under
    # the DMA bottleneck) so the wrapper never materializes a bf16 copy of x in HBM.
    x = x_ref[...].astype(jnp.bfloat16)

    # Layer 1: bf16 MXU matmul, f32 accumulate / bias-add / ReLU.
    h1 = jnp.dot(x, w1_ref[...], preferred_element_type=jnp.float32)
    h1 = jnp.maximum(h1 + b1_ref[...], 0.0)

    # Layer 2
    h2 = jnp.dot(h1.astype(jnp.bfloat16), w2_ref[...],
                 preferred_element_type=jnp.float32)
    h2 = jnp.maximum(h2 + b2_ref[...], 0.0)

    # Layer 3 (no activation)
    out = jnp.dot(h2.astype(jnp.bfloat16), w3_ref[...],
                  preferred_element_type=jnp.float32)
    o_ref[...] = (out + b3_ref[...]).astype(o_ref.dtype)


# ------------------------------------------------------------------------- wrapper


def prepare_params(params):
    """Pad every feature dim to a multiple of 128 and cast weights to bf16 ONCE.

    Padding with zeros is numerically exact.  Do this outside the per-call path so
    parameters that never change between forward calls don't burn HBM bandwidth on
    every invocation of this mem-bound op.
    """
    W1, b1 = params["W1"], params["b1"]
    W2, b2 = params["W2"], params["b2"]
    W3, b3 = params["W3"], params["b3"]
    D_in, H1 = W1.shape
    H2, D_out = W2.shape[1], W3.shape[1]
    D_in_p, H1_p = _round_up(D_in, LANE), _round_up(H1, LANE)
    H2_p, D_out_p = _round_up(H2, LANE), _round_up(D_out, LANE)
    return {
        "W1": _pad2(W1, D_in_p, H1_p).astype(jnp.bfloat16),
        "b1": _pad2(b1, 1, H1_p).astype(jnp.float32),
        "W2": _pad2(W2, H1_p, H2_p).astype(jnp.bfloat16),
        "b2": _pad2(b2, 1, H2_p).astype(jnp.float32),
        "W3": _pad2(W3, H2_p, D_out_p).astype(jnp.bfloat16),
        "b3": _pad2(b3, 1, D_out_p).astype(jnp.float32),
    }


@functools.partial(jax.jit, static_argnames=("d_out", "tm", "out_dtype"))
def mlp_forward(x, prepped, *, d_out, tm=512, out_dtype=None):
    """x: (N, input_dim).  prepped: output of prepare_params.  d_out: true output dim."""
    N, D_in = x.shape
    out_dtype = x.dtype if out_dtype is None else jnp.dtype(out_dtype)

    W1p, b1p = prepped["W1"], prepped["b1"]
    W2p, b2p = prepped["W2"], prepped["b2"]
    W3p, b3p = prepped["W3"], prepped["b3"]
    D_in_p, H1_p = W1p.shape
    H2_p, D_out_p = W2p.shape[1], W3p.shape[1]
    assert D_in_p == _round_up(D_in, LANE), "prepped params don't match x's feature dim"

    # ---- row tiling -------------------------------------------------------------
    # Balance tiles so padded-row waste stays under one lane tile (e.g. N=600 ->
    # 2 x 384 instead of 1024), and on v7x force >= 2 tiles so both TCs get work.
    num_tc = _num_tensorcores()
    N_lane = _round_up(N, LANE)
    num_tiles = _cdiv(N_lane, tm)
    if num_tc >= 2 and N_lane >= 2 * LANE:
        num_tiles = max(num_tiles, 2)
    tm_eff = _round_up(_cdiv(N_lane, num_tiles), LANE)
    grid_n = _cdiv(N_lane, tm_eff)
    N_pad = tm_eff * grid_n

    # Pad x only when actually needed; the bf16 cast happens inside the kernel.
    xp = x if (N_pad, D_in_p) == (N, D_in) else _pad2(x, N_pad, D_in_p)

    # ---- VMEM budget (generation-aware) ------------------------------------------
    x_tile_bytes = tm_eff * D_in_p * x.dtype.itemsize          # double-buffered
    o_tile_bytes = tm_eff * D_out_p * out_dtype.itemsize        # double-buffered
    h_bytes = tm_eff * (H1_p + H2_p) * (4 + 2)                  # f32 h + bf16 re-cast
    w_bytes = 2 * (D_in_p * H1_p + H1_p * H2_p + H2_p * D_out_p) \
        + 4 * (H1_p + H2_p + D_out_p)                           # single-buffered
    need = 2 * (x_tile_bytes + o_tile_bytes) + w_bytes + h_bytes + (2 << 20)
    cap = int(_vmem_capacity_bytes() * 0.8)                     # leave headroom
    vmem_limit = max(32 << 20, min(need, cap))

    # Grid-invariant, single-buffered resident blocks for weights/biases.
    full = lambda shape: pl.BlockSpec(
        shape, lambda i: (0,) * len(shape), pipeline_mode=pl.Buffered(1))

    out_padded = pl.pallas_call(
        _mlp_kernel,
        out_shape=jax.ShapeDtypeStruct((N_pad, D_out_p), out_dtype),
        grid_spec=pltpu.PrefetchScalarGridSpec(
            num_scalar_prefetch=0,
            grid=(grid_n,),
            in_specs=[
                pl.BlockSpec((tm_eff, D_in_p), lambda i: (i, 0)),  # x row tile (streamed)
                full((D_in_p, H1_p)),                              # W1 (resident)
                full((1, H1_p)),                                   # b1
                full((H1_p, H2_p)),                                # W2
                full((1, H2_p)),                                   # b2
                full((H2_p, D_out_p)),                             # W3
                full((1, D_out_p)),                                # b3
            ],
            out_specs=pl.BlockSpec((tm_eff, D_out_p), lambda i: (i, 0)),
        ),
        compiler_params=pltpu.CompilerParams(
            dimension_semantics=("parallel",),
            vmem_limit_bytes=vmem_limit,
        ),
    )(xp, W1p, b1p, W2p, b2p, W3p, b3p)

    # Slice off row / lane padding only when there is any.
    if (N_pad, D_out_p) == (N, d_out):
        return out_padded
    return out_padded[:N, :d_out]


# --------------------------------------------------------------------- references


def init_mlp_params(key, input_dim, output_dim):
    """Deterministic init mimicking nn.Linear's U(-1/sqrt(fan_in), 1/sqrt(fan_in))."""
    dims = [(input_dim, 128), (128, 64), (64, output_dim)]
    params = {}
    for idx, (fi, fo) in enumerate(dims, start=1):
        key, kw, kb = jax.random.split(key, 3)
        bound = 1.0 / jnp.sqrt(jnp.float32(fi))
        params[f"W{idx}"] = jax.random.uniform(
            kw, (fi, fo), jnp.float32, minval=-bound, maxval=bound)
        params[f"b{idx}"] = jax.random.uniform(
            kb, (1, fo), jnp.float32, minval=-bound, maxval=bound)
    return params


def mlp_reference_f32(x, p):
    h1 = jnp.maximum(x @ p["W1"] + p["b1"], 0.0)
    h2 = jnp.maximum(h1 @ p["W2"] + p["b2"], 0.0)
    return h2 @ p["W3"] + p["b3"]


def mlp_reference_bf16(x, p):
    # Same arithmetic as the kernel: bf16 matmul inputs, f32 accumulation/elementwise.
    bf = jnp.bfloat16
    h1 = jnp.dot(x.astype(bf), p["W1"].astype(bf),
                 preferred_element_type=jnp.float32) + p["b1"]
    h1 = jnp.maximum(h1, 0.0)
    h2 = jnp.dot(h1.astype(bf), p["W2"].astype(bf),
                 preferred_element_type=jnp.float32) + p["b2"]
    h2 = jnp.maximum(h2, 0.0)
    return jnp.dot(h2.astype(bf), p["W3"].astype(bf),
                   preferred_element_type=jnp.float32) + p["b3"]


if __name__ == "__main__":
    key = jax.random.PRNGKey(0)
    k_x, k_p = jax.random.split(key)

    N, input_dim, output_dim = 64, 32, 16  # small synthetic shapes
    x = jax.random.normal(k_x, (N, input_dim), jnp.float32)
    params = init_mlp_params(k_p, input_dim, output_dim)
    prepped = prepare_params(params)  # pad + bf16-cast weights exactly once

    # Default (f32) output path.
    out = mlp_forward(x, prepped, d_out=output_dim, tm=512)
    out = jax.block_until_ready(out)
    assert out.shape == (N, output_dim) and out.dtype == jnp.float32

    ref_bf16 = mlp_reference_bf16(x, params)   # precision-matched reference
    ref_f32 = mlp_reference_f32(x, params)     # original-module (f32) reference
    assert jnp.allclose(out, ref_bf16, atol=5e-3, rtol=5e-3)
    assert jnp.allclose(out, ref_f32, atol=5e-2, rtol=5e-2)

    # bf16-output path (mem-bound win: halves the dominant output HBM write).
    out_bf16 = mlp_forward(x, prepped, d_out=output_dim, tm=512, out_dtype=jnp.bfloat16)
    out_bf16 = jax.block_until_ready(out_bf16)
    assert out_bf16.shape == (N, output_dim) and out_bf16.dtype == jnp.bfloat16
    assert jnp.allclose(out_bf16.astype(jnp.float32), ref_bf16, atol=3e-2, rtol=3e-2)

    print("KERNEL_OK")
</pallas_src>

<mosaic_0001>
module attributes {stable_mosaic.version = 11 : i64} {
  func.func @_mlp_kernel(%arg0: i32, %arg1: memref<128x128xf32, #tpu.memory_space<vmem>>, %arg2: memref<128x128xbf16, #tpu.memory_space<vmem>>, %arg3: memref<1x128xf32, #tpu.memory_space<vmem>>, %arg4: memref<128x128xbf16, #tpu.memory_space<vmem>>, %arg5: memref<1x128xf32, #tpu.memory_space<vmem>>, %arg6: memref<128x128xbf16, #tpu.memory_space<vmem>>, %arg7: memref<1x128xf32, #tpu.memory_space<vmem>>, %arg8: memref<128x128xf32, #tpu.memory_space<vmem>>) attributes {dimension_semantics = [#tpu.dimension_semantics<parallel>], iteration_bounds = array<i64: 1>, scalar_prefetch = 0 : i64, scratch_operands = 0 : i64, tpu.core_type = #tpu.core_type<tc>, window_params = [{transform_indices = @transform_0, window_bounds = array<i64: 128, 128>}, {pipeline_mode = #tpu.pipeline_mode<synchronous>, transform_indices = @transform_1, window_bounds = array<i64: 128, 128>}, {pipeline_mode = #tpu.pipeline_mode<synchronous>, transform_indices = @transform_2, window_bounds = array<i64: 1, 128>}, {pipeline_mode = #tpu.pipeline_mode<synchronous>, transform_indices = @transform_3, window_bounds = array<i64: 128, 128>}, {pipeline_mode = #tpu.pipeline_mode<synchronous>, transform_indices = @transform_4, window_bounds = array<i64: 1, 128>}, {pipeline_mode = #tpu.pipeline_mode<synchronous>, transform_indices = @transform_5, window_bounds = array<i64: 128, 128>}, {pipeline_mode = #tpu.pipeline_mode<synchronous>, transform_indices = @transform_6, window_bounds = array<i64: 1, 128>}, {transform_indices = @transform_7, window_bounds = array<i64: 128, 128>}]} {
    %c0 = arith.constant 0 : index
    %c0_0 = arith.constant 0 : index
    %0 = vector.load %arg1[%c0, %c0_0] : memref<128x128xf32, #tpu.memory_space<vmem>>, vector<128x128xf32>
    %1 = arith.truncf %0 : vector<128x128xf32> to vector<128x128xbf16>
    %c0_1 = arith.constant 0 : index
    %c0_2 = arith.constant 0 : index
    %2 = vector.load %arg2[%c0_1, %c0_2] : memref<128x128xbf16, #tpu.memory_space<vmem>>, vector<128x128xbf16>
    %cst = arith.constant dense<0.000000e+00> : vector<128x128xf32>
    %3 = tpu.matmul %1, %2, %cst {dimension_numbers = #tpu.dot_dimension_numbers<[1], [0], [0], [1], [0, 0, 1, 1], [], []>} : vector<128x128xbf16>, vector<128x128xbf16>, vector<128x128xf32> -> vector<128x128xf32>
    %c0_3 = arith.constant 0 : index
    %c0_4 = arith.constant 0 : index
    %4 = vector.load %arg3[%c0_3, %c0_4] : memref<1x128xf32, #tpu.memory_space<vmem>>, vector<1x128xf32>
    %5 = vector.broadcast %4 : vector<1x128xf32> to vector<128x128xf32>
    %6 = arith.addf %3, %5 : vector<128x128xf32>
    %cst_5 = arith.constant 0.000000e+00 : f32
    %7 = vector.broadcast %cst_5 : f32 to vector<128x128xf32>
    %8 = arith.maximumf %6, %7 : vector<128x128xf32>
    %9 = arith.truncf %8 : vector<128x128xf32> to vector<128x128xbf16>
    %c0_6 = arith.constant 0 : index
    %c0_7 = arith.constant 0 : index
    %10 = vector.load %arg4[%c0_6, %c0_7] : memref<128x128xbf16, #tpu.memory_space<vmem>>, vector<128x128xbf16>
    %cst_8 = arith.constant dense<0.000000e+00> : vector<128x128xf32>
    %11 = tpu.matmul %9, %10, %cst_8 {dimension_numbers = #tpu.dot_dimension_numbers<[1], [0], [0], [1], [0, 0, 1, 1], [], []>} : vector<128x128xbf16>, vector<128x128xbf16>, vector<128x128xf32> -> vector<128x128xf32>
    %c0_9 = arith.constant 0 : index
    %c0_10 = arith.constant 0 : index
    %12 = vector.load %arg5[%c0_9, %c0_10] : memref<1x128xf32, #tpu.memory_space<vmem>>, vector<1x128xf32>
    %13 = vector.broadcast %12 : vector<1x128xf32> to vector<128x128xf32>
    %14 = arith.addf %11, %13 : vector<128x128xf32>
    %cst_11 = arith.constant 0.000000e+00 : f32
    %15 = vector.broadcast %cst_11 : f32 to vector<128x128xf32>
    %16 = arith.maximumf %14, %15 : vector<128x128xf32>
    %17 = arith.truncf %16 : vector<128x128xf32> to vector<128x128xbf16>
    %c0_12 = arith.constant 0 : index
    %c0_13 = arith.constant 0 : index
    %18 = vector.load %arg6[%c0_12, %c0_13] : memref<128x128xbf16, #tpu.memory_space<vmem>>, vector<128x128xbf16>
    %cst_14 = arith.constant dense<0.000000e+00> : vector<128x128xf32>
    %19 = tpu.matmul %17, %18, %cst_14 {dimension_numbers = #tpu.dot_dimension_numbers<[1], [0], [0], [1], [0, 0, 1, 1], [], []>} : vector<128x128xbf16>, vector<128x128xbf16>, vector<128x128xf32> -> vector<128x128xf32>
    %c0_15 = arith.constant 0 : index
    %c0_16 = arith.constant 0 : index
    %20 = vector.load %arg7[%c0_15, %c0_16] : memref<1x128xf32, #tpu.memory_space<vmem>>, vector<1x128xf32>
    %21 = vector.broadcast %20 : vector<1x128xf32> to vector<128x128xf32>
    %22 = arith.addf %19, %21 : vector<128x128xf32>
    %c0_17 = arith.constant 0 : index
    %c0_18 = arith.constant 0 : index
    %23 = vector.load %arg8[%c0_17, %c0_18] : memref<128x128xf32, #tpu.memory_space<vmem>>, vector<128x128xf32>
    tpu.vector_store %arg8[%c0_17, %c0_18], %22 {strides = array<i32>} : memref<128x128xf32, #tpu.memory_space<vmem>>, vector<128x128xf32>,
    return
  }
  func.func @transform_0(%arg0: i32) -> (i32, i32) {
    %c0_i32 = arith.constant 0 : i32
    %c0_i32_0 = arith.constant 0 : i32
    return %arg0, %c0_i32 : i32, i32
  }
  func.func @transform_1(%arg0: i32) -> (i32, i32) {
    %c0_i32 = arith.constant 0 : i32
    %c0_i32_0 = arith.constant 0 : i32
    %c0_i32_1 = arith.constant 0 : i32
    return %c0_i32, %c0_i32_0 : i32, i32
  }
  func.func @transform_2(%arg0: i32) -> (i32, i32) {
    %c0_i32 = arith.constant 0 : i32
    %c0_i32_0 = arith.constant 0 : i32
    %c0_i32_1 = arith.constant 0 : i32
    return %c0_i32, %c0_i32_0 : i32, i32
  }
  func.func @transform_3(%arg0: i32) -> (i32, i32) {
    %c0_i32 = arith.constant 0 : i32
    %c0_i32_0 = arith.constant 0 : i32
    %c0_i32_1 = arith.constant 0 : i32
    return %c0_i32, %c0_i32_0 : i32, i32
  }
  func.func @transform_4(%arg0: i32) -> (i32, i32) {
    %c0_i32 = arith.constant 0 : i32
    %c0_i32_0 = arith.constant 0 : i32
    %c0_i32_1 = arith.constant 0 : i32
    return %c0_i32, %c0_i32_0 : i32, i32
  }
  func.func @transform_5(%arg0: i32) -> (i32, i32) {
    %c0_i32 = arith.constant 0 : i32
    %c0_i32_0 = arith.constant 0 : i32
    %c0_i32_1 = arith.constant 0 : i32
    return %c0_i32, %c0_i32_0 : i32, i32
  }
  func.func @transform_6(%arg0: i32) -> (i32, i32) {
    %c0_i32 = arith.constant 0 : i32
    %c0_i32_0 = arith.constant 0 : i32
    %c0_i32_1 = arith.constant 0 : i32
    return %c0_i32, %c0_i32_0 : i32, i32
  }
  func.func @transform_7(%arg0: i32) -> (i32, i32) {
    %c0_i32 = arith.constant 0 : i32
    %c0_i32_0 = arith.constant 0 : i32
    return %arg0, %c0_i32 : i32, i32
  }
}

</mosaic_0001>

<llo_original>
// kernel: mlp_forward.1
$region0: #{mlp_forward.1}
  #allocation0 [shape = 'u32[]', space=smem, size = 0x4, offset = 0x4, fixed_abs, tag = 'smem constant byte address 0x4 - core index']
  #allocation1 [shape = 'u32[144,128]{1,0:T(1,128)}', space=vmem, size = 0x12000, scoped, tag = 'internal scratch']
  %s0 = inlined_call_operand.vmem [shape: f32[128,128], index: 0, kind: input, shape index: {}]
  %s1 = inlined_call_operand.vmem [shape: bf16[128,128], index: 1, kind: input, shape index: {}]
  %s2 = inlined_call_operand.vmem [shape: f32[1,128], index: 2, kind: input, shape index: {}]
  %s3 = inlined_call_operand.vmem [shape: bf16[128,128], index: 3, kind: input, shape index: {}]
  %s4 = inlined_call_operand.vmem [shape: f32[1,128], index: 4, kind: input, shape index: {}]
  %s5 = inlined_call_operand.vmem [shape: bf16[128,128], index: 5, kind: input, shape index: {}]
  %s6 = inlined_call_operand.vmem [shape: f32[1,128], index: 6, kind: input, shape index: {}]
  %s7 = inlined_call_operand.vmem [shape: f32[128,128], index: 7, kind: output, shape index: {}]
  %s8 = sld [smem:[#allocation0]]
  $region38: #{mlp_forward.1} parent=0
    _
  %s10 = ssub.s32 1, %s8
  %s11 = scalar_select 0, %s10, %s8
  // Predicated region
  $region2: #{mlp_forward.1} parent=0 // pred_check
    _
  $region3: #{mlp_forward.1} parent=0 // pred_check_branch
    %13 = sbr.rel (0) target = $region5
  $region4: #{mlp_forward.1} parent=0 // pred_region
    _
  $region5: #{mlp_forward.1} parent=0 // pred_fallthru
    _
  // Predicated region
  $region6: #{mlp_forward.1} parent=0 // pred_check
    _
  $region7: #{mlp_forward.1} parent=0 // pred_check_branch
    %15 = sbr.rel (0) target = $region9
  $region8: #{mlp_forward.1} parent=0 // pred_region
    _
  $region9: #{mlp_forward.1} parent=0 // pred_fallthru
    _
  // Predicated region
  $region10: #{mlp_forward.1} parent=0 // pred_check
    _
  $region11: #{mlp_forward.1} parent=0 // pred_check_branch
    %17 = sbr.rel (0) target = $region13
  $region12: #{mlp_forward.1} parent=0 // pred_region
    _
  $region13: #{mlp_forward.1} parent=0 // pred_fallthru
    _
  // Predicated region
  $region14: #{mlp_forward.1} parent=0 // pred_check
    _
  $region15: #{mlp_forward.1} parent=0 // pred_check_branch
    %19 = sbr.rel (0) target = $region17
  $region16: #{mlp_forward.1} parent=0 // pred_region
    _
  $region17: #{mlp_forward.1} parent=0 // pred_fallthru
    _
  // Predicated region
  $region18: #{mlp_forward.1} parent=0 // pred_check
    _
  $region19: #{mlp_forward.1} parent=0 // pred_check_branch
    %21 = sbr.rel (0) target = $region21
  $region20: #{mlp_forward.1} parent=0 // pred_region
    _
  $region21: #{mlp_forward.1} parent=0 // pred_fallthru
    _
  // Predicated region
  $region22: #{mlp_forward.1} parent=0 // pred_check
    _
  $region23: #{mlp_forward.1} parent=0 // pred_check_branch
    %23 = sbr.rel (0) target = $region25
  $region24: #{mlp_forward.1} parent=0 // pred_region
    _
  $region25: #{mlp_forward.1} parent=0 // pred_fallthru
    _
  // Predicated region
  $region26: #{mlp_forward.1} parent=0 // pred_check
    _
  $region27: #{mlp_forward.1} parent=0 // pred_check_branch
    %25 = sbr.rel (0) target = $region29
  $region28: #{mlp_forward.1} parent=0 // pred_region
    _
  $region29: #{mlp_forward.1} parent=0 // pred_fallthru
    _
  %v27 = vld [vmem:[%s0] sm:$0xff]
  %v28 = vld [vmem:[%s0 + $0x8] sm:$0xff]
  %v29 = vld [vmem:[%s0 + $0x10] sm:$0xff]
  %v30 = vld [vmem:[%s0 + $0x18] sm:$0xff]
  %v31 = vld [vmem:[%s0 + $0x20] sm:$0xff]
  %v32 = vld [vmem:[%s0 + $0x28] sm:$0xff]
  %v33 = vld [vmem:[%s0 + $0x30] sm:$0xff]
  %v34 = vld [vmem:[%s0 + $0x38] sm:$0xff]
  %v35 = vld [vmem:[%s0 + $0x40] sm:$0xff]
  %v36 = vld [vmem:[%s0 + $0x48] sm:$0xff]
  %v37 = vld [vmem:[%s0 + $0x50] sm:$0xff]
  %v38 = vld [vmem:[%s0 + $0x58] sm:$0xff]
  %v39 = vld [vmem:[%s0 + $0x60] sm:$0xff]
  %v40 = vld [vmem:[%s0 + $0x68] sm:$0xff]
  %v41 = vld [vmem:[%s0 + $0x70] sm:$0xff]
  %v42 = vld [vmem:[%s0 + $0x78] sm:$0xff]
  %v43 = vpack.c.bf16 %v28, %v27
  %v44 = vpack.c.bf16 %v30, %v29
  %v45 = vpack.c.bf16 %v32, %v31
  %v46 = vpack.c.bf16 %v34, %v33
  %v47 = vpack.c.bf16 %v36, %v35
  %v48 = vpack.c.bf16 %v38, %v37
  %v49 = vpack.c.bf16 %v40, %v39
  %v50 = vpack.c.bf16 %v42, %v41
  %v51 = vld [vmem:[%s1] sm:$0xf]
  %v52 = vld [vmem:[%s1 + $0x4] sm:$0xf]
  %v53 = vld [vmem:[%s1 + $0x8] sm:$0xf]
  %v54 = vld [vmem:[%s1 + $0xc] sm:$0xf]
  %v55 = vld [vmem:[%s1 + $0x10] sm:$0xf]
  %v56 = vld [vmem:[%s1 + $0x14] sm:$0xf]
  %v57 = vld [vmem:[%s1 + $0x18] sm:$0xf]
  %v58 = vld [vmem:[%s1 + $0x1c] sm:$0xf]
  %v59 = vld [vmem:[%s1 + $0x20] sm:$0xf]
  %v60 = vld [vmem:[%s1 + $0x24] sm:$0xf]
  %v61 = vld [vmem:[%s1 + $0x28] sm:$0xf]
  %v62 = vld [vmem:[%s1 + $0x2c] sm:$0xf]
  %v63 = vld [vmem:[%s1 + $0x30] sm:$0xf]
  %v64 = vld [vmem:[%s1 + $0x34] sm:$0xf]
  %v65 = vld [vmem:[%s1 + $0x38] sm:$0xf]
  %v66 = vld [vmem:[%s1 + $0x3c] sm:$0xf]
  %v67 = vld [vmem:[%s2] sm:$0x1]
  %v69 = vlaneseq
  %v70 = vshrl.u32 %v69, 7
  %v71 = vsub.s32 0, %v70
  %v72 = vrot.slane %v67, %v71
  %v90 = vunpack.c.l.b16 %v51
  %v91 = vunpack.c.l.b16 %v52
  %v92 = vunpack.c.l.b16 %v53
  %v93 = vunpack.c.l.b16 %v54
  %v94 = vunpack.c.l.b16 %v55
  %v95 = vunpack.c.l.b16 %v56
  %v96 = vunpack.c.l.b16 %v57
  %v97 = vunpack.c.l.b16 %v58
  %v98 = vunpack.c.l.b16 %v59
  %v99 = vunpack.c.l.b16 %v60
  %v100 = vunpack.c.l.b16 %v61
  %v101 = vunpack.c.l.b16 %v62
  %v102 = vunpack.c.l.b16 %v63
  %v103 = vunpack.c.l.b16 %v64
  %v104 = vunpack.c.l.b16 %v65
  %v105 = vunpack.c.l.b16 %v66
  %v106 = vpack.c.b16 %v91, %v90
  %v107 = vpack.c.b16 %v93, %v92
  %v108 = vpack.c.b16 %v95, %v94
  %v109 = vpack.c.b16 %v97, %v96
  %v110 = vpack.c.b16 %v99, %v98
  %v111 = vpack.c.b16 %v101, %v100
  %v112 = vpack.c.b16 %v103, %v102
  %v113 = vpack.c.b16 %v105, %v104
  %122 = vmatprep.subr.bf16.mxu0 0
  %123 = vmatpush1.bf16.msra.mxu0 %v113
  %124 = vmatprep.subr.bf16.mxu0 0
  %125 = vmatpush1.bf16.msra.mxu0 %v112
  %126 = vmatprep.subr.bf16.mxu0 0
  %127 = vmatpush1.bf16.msra.mxu0 %v111
  %128 = vmatprep.subr.bf16.mxu0 0
  %129 = vmatpush1.bf16.msra.mxu0 %v110
  %130 = vmatprep.subr.bf16.mxu0 0
  %131 = vmatpush1.bf16.msra.mxu0 %v109
  %132 = vmatprep.subr.bf16.mxu0 0
  %133 = vmatpush1.bf16.msra.mxu0 %v108
  %134 = vmatprep.subr.bf16.mxu0 0
  %135 = vmatpush1.bf16.msra.mxu0 %v107
  %136 = vmatprep.subr.bf16.mxu0 0
  %137 = vmatpush1.bf16.msra.mxu0 %v106
  %138 = vmatprep.subr.bf16.mxu0 0
  %139 = vmatpush2.bf16.msra.mxu0 0
  %140 = vmatprep.subr.bf16.mxu0 0
  %141 = vmatpush2.bf16.msra.mxu0 0
  %142 = vmatprep.subr.bf16.mxu0 0
  %143 = vmatpush2.bf16.msra.mxu0 0
  %144 = vmatprep.subr.bf16.mxu0 0
  %145 = vmatpush2.bf16.msra.mxu0 0
  %146 = vmatprep.subr.bf16.mxu0 0
  %147 = vmatpush2.bf16.msra.mxu0 0
  %148 = vmatprep.subr.bf16.mxu0 0
  %149 = vmatpush2.bf16.msra.mxu0 0
  %150 = vmatprep.subr.bf16.mxu0 0
  %151 = vmatpush2.bf16.msra.mxu0 0
  %152 = vmatprep.subr.bf16.mxu0 0
  %153 = vmatpush2.bf16.msra.mxu0 0
  %154 = vmatprep.mubr.bf16.mxu0 0
  %155 = vmatmul.mubr.bf16.gmra.mxu0 %v43
  %v156 = vpop.f32.mrf.mxu0
  %v157 = vadd.f32 %v72, %v156
  %v158 = vpop.f32.mrf.mxu0
  %v159 = vpop.f32.mrf.mxu0
  %v160 = vadd.f32 %v72, %v159
  %v161 = vpop.f32.mrf.mxu0
  %162 = vmatprep.mubr.bf16.mxu0 0
  %163 = vmatmul.mubr.bf16.gmra.mxu0 %v44
  %v164 = vpop.f32.mrf.mxu0
  %v165 = vadd.f32 %v72, %v164
  %v166 = vpop.f32.mrf.mxu0
  %v167 = vpop.f32.mrf.mxu0
  %v168 = vadd.f32 %v72, %v167
  %v169 = vpop.f32.mrf.mxu0
  %170 = vmatprep.mubr.bf16.mxu0 0
  %171 = vmatmul.mubr.bf16.gmra.mxu0 %v45
  %v172 = vpop.f32.mrf.mxu0
  %v173 = vadd.f32 %v72, %v172
  %v174 = vpop.f32.mrf.mxu0
  %v175 = vpop.f32.mrf.mxu0
  %v176 = vadd.f32 %v72, %v175
  %v177 = vpop.f32.mrf.mxu0
  %178 = vmatprep.mubr.bf16.mxu0 0
  %179 = vmatmul.mubr.bf16.gmra.mxu0 %v46
  %v180 = vpop.f32.mrf.mxu0
  %v181 = vadd.f32 %v72, %v180
  %v182 = vpop.f32.mrf.mxu0
  %v183 = vpop.f32.mrf.mxu0
  %v184 = vadd.f32 %v72, %v183
  %v185 = vpop.f32.mrf.mxu0
  %186 = vmatprep.mubr.bf16.mxu0 0
  %187 = vmatmul.mubr.bf16.gmra.mxu0 %v47
  %v188 = vpop.f32.mrf.mxu0
  %v189 = vadd.f32 %v72, %v188
  %v190 = vpop.f32.mrf.mxu0
  %v191 = vpop.f32.mrf.mxu0
  %v192 = vadd.f32 %v72, %v191
  %v193 = vpop.f32.mrf.mxu0
  %194 = vmatprep.mubr.bf16.mxu0 0
  %195 = vmatmul.mubr.bf16.gmra.mxu0 %v48
  %v196 = vpop.f32.mrf.mxu0
  %v197 = vadd.f32 %v72, %v196
  %v198 = vpop.f32.mrf.mxu0
  %v199 = vpop.f32.mrf.mxu0
  %v200 = vadd.f32 %v72, %v199
  %v201 = vpop.f32.mrf.mxu0
  %202 = vmatprep.mubr.bf16.mxu0 0
  %203 = vmatmul.mubr.bf16.gmra.mxu0 %v49
  %v204 = vpop.f32.mrf.mxu0
  %v205 = vadd.f32 %v72, %v204
  %v206 = vpop.f32.mrf.mxu0
  %v207 = vpop.f32.mrf.mxu0
  %v208 = vadd.f32 %v72, %v207
  %v209 = vpop.f32.mrf.mxu0
  %210 = vmatprep.mubr.bf16.mxu0 0
  %211 = vmatmul.mubr.bf16.gmra.mxu0 %v50
  %v212 = vpop.f32.mrf.mxu0
  %v213 = vadd.f32 %v72, %v212
  %v214 = vpop.f32.mrf.mxu0
  %v215 = vpop.f32.mrf.mxu0
  %v216 = vadd.f32 %v72, %v215
  %v217 = vpop.f32.mrf.mxu0
  %218 = vdwg.mxu0
  %v219 = vmax.f32 %v157, 0.0
  %v220 = vmax.f32 %v160, 0.0
  %v221 = vmax.f32 %v165, 0.0
  %v222 = vmax.f32 %v168, 0.0
  %v223 = vmax.f32 %v173, 0.0
  %v224 = vmax.f32 %v176, 0.0
  %v225 = vmax.f32 %v181, 0.0
  %v226 = vmax.f32 %v184, 0.0
  %v227 = vmax.f32 %v189, 0.0
  %v228 = vmax.f32 %v192, 0.0
  %v229 = vmax.f32 %v197, 0.0
  %v230 = vmax.f32 %v200, 0.0
  %v231 = vmax.f32 %v205, 0.0
  %v232 = vmax.f32 %v208, 0.0
  %v233 = vmax.f32 %v213, 0.0
  %v234 = vmax.f32 %v216, 0.0
  %v235 = vpack.c.bf16 %v220, %v219
  %v236 = vpack.c.bf16 %v222, %v221
  %v237 = vpack.c.bf16 %v224, %v223
  %v238 = vpack.c.bf16 %v226, %v225
  %v239 = vpack.c.bf16 %v228, %v227
  %v240 = vpack.c.bf16 %v230, %v229
  %v241 = vpack.c.bf16 %v232, %v231
  %v242 = vpack.c.bf16 %v234, %v233
  %v243 = vld [vmem:[%s3] sm:$0xf]
  %v244 = vld [vmem:[%s3 + $0x4] sm:$0xf]
  %v245 = vld [vmem:[%s3 + $0x8] sm:$0xf]
  %v246 = vld [vmem:[%s3 + $0xc] sm:$0xf]
  %v247 = vld [vmem:[%s3 + $0x10] sm:$0xf]
  %v248 = vld [vmem:[%s3 + $0x14] sm:$0xf]
  %v249 = vld [vmem:[%s3 + $0x18] sm:$0xf]
  %v250 = vld [vmem:[%s3 + $0x1c] sm:$0xf]
  %v251 = vld [vmem:[%s3 + $0x20] sm:$0xf]
  %v252 = vld [vmem:[%s3 + $0x24] sm:$0xf]
  %v253 = vld [vmem:[%s3 + $0x28] sm:$0xf]
  %v254 = vld [vmem:[%s3 + $0x2c] sm:$0xf]
  %v255 = vld [vmem:[%s3 + $0x30] sm:$0xf]
  %v256 = vld [vmem:[%s3 + $0x34] sm:$0xf]
  %v257 = vld [vmem:[%s3 + $0x38] sm:$0xf]
  %v258 = vld [vmem:[%s3 + $0x3c] sm:$0xf]
  %v259 = vld [vmem:[%s4] sm:$0x1]
  %v261 = vlaneseq
  %v262 = vshrl.u32 %v261, 7
  %v263 = vsub.s32 0, %v262
  %v264 = vrot.slane %v259, %v263
  %v282 = vunpack.c.l.b16 %v243
  %v283 = vunpack.c.l.b16 %v244
  %v284 = vunpack.c.l.b16 %v245
  %v285 = vunpack.c.l.b16 %v246
  %v286 = vunpack.c.l.b16 %v247
  %v287 = vunpack.c.l.b16 %v248
  %v288 = vunpack.c.l.b16 %v249
  %v289 = vunpack.c.l.b16 %v250
  %v290 = vunpack.c.l.b16 %v251
  %v291 = vunpack.c.l.b16 %v252
  %v292 = vunpack.c.l.b16 %v253
  %v293 = vunpack.c.l.b16 %v254
  %v294 = vunpack.c.l.b16 %v255
  %v295 = vunpack.c.l.b16 %v256
  %v296 = vunpack.c.l.b16 %v257
  %v297 = vunpack.c.l.b16 %v258
  %v298 = vpack.c.b16 %v283, %v282
  %v299 = vpack.c.b16 %v285, %v284
  %v300 = vpack.c.b16 %v287, %v286
  %v301 = vpack.c.b16 %v289, %v288
  %v302 = vpack.c.b16 %v291, %v290
  %v303 = vpack.c.b16 %v293, %v292
  %v304 = vpack.c.b16 %v295, %v294
  %v305 = vpack.c.b16 %v297, %v296
  %314 = vmatprep.subr.bf16.mxu0 0
  %315 = vmatpush1.bf16.msra.mxu0 %v305
  %316 = vmatprep.subr.bf16.mxu0 0
  %317 = vmatpush1.bf16.msra.mxu0 %v304
  %318 = vmatprep.subr.bf16.mxu0 0
  %319 = vmatpush1.bf16.msra.mxu0 %v303
  %320 = vmatprep.subr.bf16.mxu0 0
  %321 = vmatpush1.bf16.msra.mxu0 %v302
  %322 = vmatprep.subr.bf16.mxu0 0
  %323 = vmatpush1.bf16.msra.mxu0 %v301
  %324 = vmatprep.subr.bf16.mxu0 0
  %325 = vmatpush1.bf16.msra.mxu0 %v300
  %326 = vmatprep.subr.bf16.mxu0 0
  %327 = vmatpush1.bf16.msra.mxu0 %v299
  %328 = vmatprep.subr.bf16.mxu0 0
  %329 = vmatpush1.bf16.msra.mxu0 %v298
  %330 = vmatprep.subr.bf16.mxu0 0
  %331 = vmatpush2.bf16.msra.mxu0 0
  %332 = vmatprep.subr.bf16.mxu0 0
  %333 = vmatpush2.bf16.msra.mxu0 0
  %334 = vmatprep.subr.bf16.mxu0 0
  %335 = vmatpush2.bf16.msra.mxu0 0
  %336 = vmatprep.subr.bf16.mxu0 0
  %337 = vmatpush2.bf16.msra.mxu0 0
  %338 = vmatprep.subr.bf16.mxu0 0
  %339 = vmatpush2.bf16.msra.mxu0 0
  %340 = vmatprep.subr.bf16.mxu0 0
  %341 = vmatpush2.bf16.msra.mxu0 0
  %342 = vmatprep.subr.bf16.mxu0 0
  %343 = vmatpush2.bf16.msra.mxu0 0
  %344 = vmatprep.subr.bf16.mxu0 0
  %345 = vmatpush2.bf16.msra.mxu0 0
  %346 = vmatprep.mubr.bf16.mxu0 0
  %347 = vmatmul.mubr.bf16.gmra.mxu0 %v235
  %v348 = vpop.f32.mrf.mxu0
  %v349 = vadd.f32 %v264, %v348
  %v350 = vpop.f32.mrf.mxu0
  %v351 = vpop.f32.mrf.mxu0
  %v352 = vadd.f32 %v264, %v351
  %v353 = vpop.f32.mrf.mxu0
  %354 = vmatprep.mubr.bf16.mxu0 0
  %355 = vmatmul.mubr.bf16.gmra.mxu0 %v236
  %v356 = vpop.f32.mrf.mxu0
  %v357 = vadd.f32 %v264, %v356
  %v358 = vpop.f32.mrf.mxu0
  %v359 = vpop.f32.mrf.mxu0
  %v360 = vadd.f32 %v264, %v359
  %v361 = vpop.f32.mrf.mxu0
  %362 = vmatprep.mubr.bf16.mxu0 0
  %363 = vmatmul.mubr.bf16.gmra.mxu0 %v237
  %v364 = vpop.f32.mrf.mxu0
  %v365 = vadd.f32 %v264, %v364
  %v366 = vpop.f32.mrf.mxu0
  %v367 = vpop.f32.mrf.mxu0
  %v368 = vadd.f32 %v264, %v367
  %v369 = vpop.f32.mrf.mxu0
  %370 = vmatprep.mubr.bf16.mxu0 0
  %371 = vmatmul.mubr.bf16.gmra.mxu0 %v238
  %v372 = vpop.f32.mrf.mxu0
  %v373 = vadd.f32 %v264, %v372
  %v374 = vpop.f32.mrf.mxu0
  %v375 = vpop.f32.mrf.mxu0
  %v376 = vadd.f32 %v264, %v375
  %v377 = vpop.f32.mrf.mxu0
  %378 = vmatprep.mubr.bf16.mxu0 0
  %379 = vmatmul.mubr.bf16.gmra.mxu0 %v239
  %v380 = vpop.f32.mrf.mxu0
  %v381 = vadd.f32 %v264, %v380
  %v382 = vpop.f32.mrf.mxu0
  %v383 = vpop.f32.mrf.mxu0
  %v384 = vadd.f32 %v264, %v383
  %v385 = vpop.f32.mrf.mxu0
  %386 = vmatprep.mubr.bf16.mxu0 0
  %387 = vmatmul.mubr.bf16.gmra.mxu0 %v240
  %v388 = vpop.f32.mrf.mxu0
  %v389 = vadd.f32 %v264, %v388
  %v390 = vpop.f32.mrf.mxu0
  %v391 = vpop.f32.mrf.mxu0
  %v392 = vadd.f32 %v264, %v391
  %v393 = vpop.f32.mrf.mxu0
  %394 = vmatprep.mubr.bf16.mxu0 0
  %395 = vmatmul.mubr.bf16.gmra.mxu0 %v241
  %v396 = vpop.f32.mrf.mxu0
  %v397 = vadd.f32 %v264, %v396
  %v398 = vpop.f32.mrf.mxu0
  %v399 = vpop.f32.mrf.mxu0
  %v400 = vadd.f32 %v264, %v399
  %v401 = vpop.f32.mrf.mxu0
  %402 = vmatprep.mubr.bf16.mxu0 0
  %403 = vmatmul.mubr.bf16.gmra.mxu0 %v242
  %v404 = vpop.f32.mrf.mxu0
  %v405 = vadd.f32 %v264, %v404
  %v406 = vpop.f32.mrf.mxu0
  %v407 = vpop.f32.mrf.mxu0
  %v408 = vadd.f32 %v264, %v407
  %v409 = vpop.f32.mrf.mxu0
  %410 = vdwg.mxu0
  %v411 = vmax.f32 %v349, 0.0
  %v412 = vmax.f32 %v352, 0.0
  %v413 = vmax.f32 %v357, 0.0
  %v414 = vmax.f32 %v360, 0.0
  %v415 = vmax.f32 %v365, 0.0
  %v416 = vmax.f32 %v368, 0.0
  %v417 = vmax.f32 %v373, 0.0
  %v418 = vmax.f32 %v376, 0.0
  %v419 = vmax.f32 %v381, 0.0
  %v420 = vmax.f32 %v384, 0.0
  %v421 = vmax.f32 %v389, 0.0
  %v422 = vmax.f32 %v392, 0.0
  %v423 = vmax.f32 %v397, 0.0
  %v424 = vmax.f32 %v400, 0.0
  %v425 = vmax.f32 %v405, 0.0
  %v426 = vmax.f32 %v408, 0.0
  %v427 = vpack.c.bf16 %v412, %v411
  %v428 = vpack.c.bf16 %v414, %v413
  %v429 = vpack.c.bf16 %v416, %v415
  %v430 = vpack.c.bf16 %v418, %v417
  %v431 = vpack.c.bf16 %v420, %v419
  %v432 = vpack.c.bf16 %v422, %v421
  %v433 = vpack.c.bf16 %v424, %v423
  %v434 = vpack.c.bf16 %v426, %v425
  %v435 = vld [vmem:[%s5] sm:$0xf]
  %v436 = vld [vmem:[%s5 + $0x4] sm:$0xf]
  %v437 = vld [vmem:[%s5 + $0x8] sm:$0xf]
  %v438 = vld [vmem:[%s5 + $0xc] sm:$0xf]
  %v439 = vld [vmem:[%s5 + $0x10] sm:$0xf]
  %v440 = vld [vmem:[%s5 + $0x14] sm:$0xf]
  %v441 = vld [vmem:[%s5 + $0x18] sm:$0xf]
  %v442 = vld [vmem:[%s5 + $0x1c] sm:$0xf]
  %v443 = vld [vmem:[%s5 + $0x20] sm:$0xf]
  %v444 = vld [vmem:[%s5 + $0x24] sm:$0xf]
  %v445 = vld [vmem:[%s5 + $0x28] sm:$0xf]
  %v446 = vld [vmem:[%s5 + $0x2c] sm:$0xf]
  %v447 = vld [vmem:[%s5 + $0x30] sm:$0xf]
  %v448 = vld [vmem:[%s5 + $0x34] sm:$0xf]
  %v449 = vld [vmem:[%s5 + $0x38] sm:$0xf]
  %v450 = vld [vmem:[%s5 + $0x3c] sm:$0xf]
  %v451 = vld [vmem:[%s6] sm:$0x1]
  %v453 = vlaneseq
  %v454 = vshrl.u32 %v453, 7
  %v455 = vsub.s32 0, %v454
  %v456 = vrot.slane %v451, %v455
  %v474 = vunpack.c.l.b16 %v435
  %v475 = vunpack.c.l.b16 %v436
  %v476 = vunpack.c.l.b16 %v437
  %v477 = vunpack.c.l.b16 %v438
  %v478 = vunpack.c.l.b16 %v439
  %v479 = vunpack.c.l.b16 %v440
  %v480 = vunpack.c.l.b16 %v441
  %v481 = vunpack.c.l.b16 %v442
  %v482 = vunpack.c.l.b16 %v443
  %v483 = vunpack.c.l.b16 %v444
  %v484 = vunpack.c.l.b16 %v445
  %v485 = vunpack.c.l.b16 %v446
  %v486 = vunpack.c.l.b16 %v447
  %v487 = vunpack.c.l.b16 %v448
  %v488 = vunpack.c.l.b16 %v449
  %v489 = vunpack.c.l.b16 %v450
  %v490 = vpack.c.b16 %v475, %v474
  %v491 = vpack.c.b16 %v477, %v476
  %v492 = vpack.c.b16 %v479, %v478
  %v493 = vpack.c.b16 %v481, %v480
  %v494 = vpack.c.b16 %v483, %v482
  %v495 = vpack.c.b16 %v485, %v484
  %v496 = vpack.c.b16 %v487, %v486
  %v497 = vpack.c.b16 %v489, %v488
  %506 = vmatprep.subr.bf16.mxu0 0
  %507 = vmatpush1.bf16.msra.mxu0 %v497
  %508 = vmatprep.subr.bf16.mxu0 0
  %509 = vmatpush1.bf16.msra.mxu0 %v496
  %510 = vmatprep.subr.bf16.mxu0 0
  %511 = vmatpush1.bf16.msra.mxu0 %v495
  %512 = vmatprep.subr.bf16.mxu0 0
  %513 = vmatpush1.bf16.msra.mxu0 %v494
  %514 = vmatprep.subr.bf16.mxu0 0
  %515 = vmatpush1.bf16.msra.mxu0 %v493
  %516 = vmatprep.subr.bf16.mxu0 0
  %517 = vmatpush1.bf16.msra.mxu0 %v492
  %518 = vmatprep.subr.bf16.mxu0 0
  %519 = vmatpush1.bf16.msra.mxu0 %v491
  %520 = vmatprep.subr.bf16.mxu0 0
  %521 = vmatpush1.bf16.msra.mxu0 %v490
  %522 = vmatprep.subr.bf16.mxu0 0
  %523 = vmatpush2.bf16.msra.mxu0 0
  %524 = vmatprep.subr.bf16.mxu0 0
  %525 = vmatpush2.bf16.msra.mxu0 0
  %526 = vmatprep.subr.bf16.mxu0 0
  %527 = vmatpush2.bf16.msra.mxu0 0
  %528 = vmatprep.subr.bf16.mxu0 0
  %529 = vmatpush2.bf16.msra.mxu0 0
  %530 = vmatprep.subr.bf16.mxu0 0
  %531 = vmatpush2.bf16.msra.mxu0 0
  %532 = vmatprep.subr.bf16.mxu0 0
  %533 = vmatpush2.bf16.msra.mxu0 0
  %534 = vmatprep.subr.bf16.mxu0 0
  %535 = vmatpush2.bf16.msra.mxu0 0
  %536 = vmatprep.subr.bf16.mxu0 0
  %537 = vmatpush2.bf16.msra.mxu0 0
  %538 = vmatprep.mubr.bf16.mxu0 0
  %539 = vmatmul.mubr.bf16.gmra.mxu0 %v427
  %v540 = vpop.f32.mrf.mxu0
  %v541 = vadd.f32 %v456, %v540
  %v542 = vpop.f32.mrf.mxu0
  %v543 = vpop.f32.mrf.mxu0
  %v544 = vadd.f32 %v456, %v543
  %v545 = vpop.f32.mrf.mxu0
  %546 = vmatprep.mubr.bf16.mxu0 0
  %547 = vmatmul.mubr.bf16.gmra.mxu0 %v428
  %v548 = vpop.f32.mrf.mxu0
  %v549 = vadd.f32 %v456, %v548
  %v550 = vpop.f32.mrf.mxu0
  %v551 = vpop.f32.mrf.mxu0
  %v552 = vadd.f32 %v456, %v551
  %v553 = vpop.f32.mrf.mxu0
  %554 = vmatprep.mubr.bf16.mxu0 0
  %555 = vmatmul.mubr.bf16.gmra.mxu0 %v429
  %v556 = vpop.f32.mrf.mxu0
  %v557 = vadd.f32 %v456, %v556
  %v558 = vpop.f32.mrf.mxu0
  %v559 = vpop.f32.mrf.mxu0
  %v560 = vadd.f32 %v456, %v559
  %v561 = vpop.f32.mrf.mxu0
  %562 = vmatprep.mubr.bf16.mxu0 0
  %563 = vmatmul.mubr.bf16.gmra.mxu0 %v430
  %v564 = vpop.f32.mrf.mxu0
  %v565 = vadd.f32 %v456, %v564
  %v566 = vpop.f32.mrf.mxu0
  %v567 = vpop.f32.mrf.mxu0
  %v568 = vadd.f32 %v456, %v567
  %v569 = vpop.f32.mrf.mxu0
  %570 = vmatprep.mubr.bf16.mxu0 0
  %571 = vmatmul.mubr.bf16.gmra.mxu0 %v431
  %v572 = vpop.f32.mrf.mxu0
  %v573 = vadd.f32 %v456, %v572
  %v574 = vpop.f32.mrf.mxu0
  %v575 = vpop.f32.mrf.mxu0
  %v576 = vadd.f32 %v456, %v575
  %v577 = vpop.f32.mrf.mxu0
  %578 = vmatprep.mubr.bf16.mxu0 0
  %579 = vmatmul.mubr.bf16.gmra.mxu0 %v432
  %v580 = vpop.f32.mrf.mxu0
  %v581 = vadd.f32 %v456, %v580
  %v582 = vpop.f32.mrf.mxu0
  %v583 = vpop.f32.mrf.mxu0
  %v584 = vadd.f32 %v456, %v583
  %v585 = vpop.f32.mrf.mxu0
  %586 = vmatprep.mubr.bf16.mxu0 0
  %587 = vmatmul.mubr.bf16.gmra.mxu0 %v433
  %v588 = vpop.f32.mrf.mxu0
  %v589 = vadd.f32 %v456, %v588
  %v590 = vpop.f32.mrf.mxu0
  %v591 = vpop.f32.mrf.mxu0
  %v592 = vadd.f32 %v456, %v591
  %v593 = vpop.f32.mrf.mxu0
  %594 = vmatprep.mubr.bf16.mxu0 0
  %595 = vmatmul.mubr.bf16.gmra.mxu0 %v434
  %v596 = vpop.f32.mrf.mxu0
  %v597 = vadd.f32 %v456, %v596
  %v598 = vpop.f32.mrf.mxu0
  %v599 = vpop.f32.mrf.mxu0
  %v600 = vadd.f32 %v456, %v599
  %v601 = vpop.f32.mrf.mxu0
  %602 = vdwg.mxu0
  %603 = vst [vmem:[%s7] sm:$0xff] %v541
  %604 = vst [vmem:[%s7 + $0x8] sm:$0xff] %v544
  %605 = vst [vmem:[%s7 + $0x10] sm:$0xff] %v549
  %606 = vst [vmem:[%s7 + $0x18] sm:$0xff] %v552
  %607 = vst [vmem:[%s7 + $0x20] sm:$0xff] %v557
  %608 = vst [vmem:[%s7 + $0x28] sm:$0xff] %v560
  %609 = vst [vmem:[%s7 + $0x30] sm:$0xff] %v565
  %610 = vst [vmem:[%s7 + $0x38] sm:$0xff] %v568
  %611 = vst [vmem:[%s7 + $0x40] sm:$0xff] %v573
  %612 = vst [vmem:[%s7 + $0x48] sm:$0xff] %v576
  %613 = vst [vmem:[%s7 + $0x50] sm:$0xff] %v581
  %614 = vst [vmem:[%s7 + $0x58] sm:$0xff] %v584
  %615 = vst [vmem:[%s7 + $0x60] sm:$0xff] %v589
  %616 = vst [vmem:[%s7 + $0x68] sm:$0xff] %v592
  %617 = vst [vmem:[%s7 + $0x70] sm:$0xff] %v597
  %618 = vst [vmem:[%s7 + $0x78] sm:$0xff] %v600
  // Predicated region
  $region30: #{mlp_forward.1} parent=0 // pred_check
    _
  $region31: #{mlp_forward.1} parent=0 // pred_check_branch
    %620 = sbr.rel (0) target = $region33
  $region32: #{mlp_forward.1} parent=0 // pred_region
    _
  $region33: #{mlp_forward.1} parent=0 // pred_fallthru
    _
  // Predicated region
  $region34: #{mlp_forward.1} parent=0 // pred_check
    _
  $region35: #{mlp_forward.1} parent=0 // pred_check_branch
    %622 = sbr.rel (0) target = $region37
  $region36: #{mlp_forward.1} parent=0 // pred_region
    _
  $region37: #{mlp_forward.1} parent=0 // pred_fallthru
    _

</llo_original>
